<compile_context>
chip_gen: v6e
topology: v6e:2x2x1
jax: 0.10.0
libtpu: 0.0.40
codegen_flags: <defaults>
</compile_context>

<pallas_src>
import numpy as np
import jax
import jax.numpy as jnp
from jax import lax
from jax.experimental import pallas as pl
from jax.experimental.pallas import tpu as pltpu


def _laplacian_kernel(x_ref, wm_ref, o_ref):
    # x_ref : (H, L) VMEM — P planes packed along lanes (L = P*W)
    # wm_ref: (9, L) VMEM — per-lane (weight * column-validity) for each tap
    # o_ref : (H, L) VMEM output
    H, L = x_ref.shape
    x = x_ref[...].astype(jnp.float32)
    wm = wm_ref[...].astype(jnp.float32)

    row = lax.broadcasted_iota(jnp.int32, (H, 1), 0)
    acc = jnp.zeros((H, L), jnp.float32)

    for di in (-1, 0, 1):
        if di == 0:
            xr = x                                     # no roll, no row mask
        else:
            # xr[i, j] == x[i + di, j], rows wrapped -> zeroed by row mask
            xr = pltpu.roll(x, shift=(-di) % H, axis=0)
            rmask = ((row + di >= 0) & (row + di < H)).astype(jnp.float32)
            xr = xr * rmask
        for dj in (-1, 0, 1):
            k = (di + 1) * 3 + (dj + 1)
            if dj == 0:
                xc = xr
            else:
                # xc[i, j] == x[i + di, j + dj]; cross-plane / wrapped lanes
                # are zeroed because wm[k] already contains the column mask.
                xc = pltpu.roll(xr, shift=(-dj) % L, axis=1)
            acc = acc + wm[k] * xc

    # clamp(min=0)
    o_ref[...] = jnp.maximum(acc, 0.0).astype(o_ref.dtype)


def _build_weight_masks(weights, C, W, G, P):
    """wm[g, k, l] = weights[channel(g, l), dk] * column_validity(l, dk)."""
    L = P * W
    w = weights.reshape(C, 9).astype(jnp.float32)            # (C, 9)
    lane = jnp.arange(L)
    q = lane % W                                             # column in plane
    p = lane // W                                            # plane slot
    # channel of each lane in each group (padded planes: any channel is fine,
    # their input is zero): (G, L)
    ch = (jnp.arange(G)[:, None] * P + p[None, :]) % C
    w_lane = w[ch]                                           # (G, L, 9)
    djs = jnp.array([dj for _ in (-1, 0, 1) for dj in (-1, 0, 1)])  # (9,)
    colvalid = ((q[None, :] + djs[:, None] >= 0) &
                (q[None, :] + djs[:, None] < W)).astype(jnp.float32)  # (9, L)
    wm = jnp.transpose(w_lane, (0, 2, 1)) * colvalid[None]   # (G, 9, L)
    return wm


def laplacian_conv_layer(x, weights):
    """x: (N, C, H, W) float32; weights: (C, 1, 3, 3) float32 (groups=C)."""
    N, C, H, W = x.shape
    NC = N * C
    # Pack P planes side-by-side along the lane axis (lane-dense output).
    P = max(1, (128 + W - 1) // W) if W < 128 else 1
    G = (NC + P - 1) // P
    L = P * W
    pad = G * P - NC

    x_flat = x.reshape(NC, H, W)
    if pad:
        x_flat = jnp.concatenate(
            [x_flat, jnp.zeros((pad, H, W), x.dtype)], axis=0)
    x_packed = (x_flat.reshape(G, P, H, W)
                .transpose(0, 2, 1, 3)
                .reshape(G, H, L))

    wm = _build_weight_masks(weights, C, W, G, P)

    out_packed = pl.pallas_call(
        _laplacian_kernel,
        out_shape=jax.ShapeDtypeStruct((G, H, L), x.dtype),
        grid_spec=pltpu.PrefetchScalarGridSpec(
            num_scalar_prefetch=0,
            grid=(G,),
            in_specs=[
                pl.BlockSpec((pl.Squeezed(), H, L), lambda g: (g, 0, 0)),
                pl.BlockSpec((pl.Squeezed(), 9, L), lambda g: (g, 0, 0)),
            ],
            out_specs=pl.BlockSpec((pl.Squeezed(), H, L),
                                   lambda g: (g, 0, 0)),
        ),
        compiler_params=pltpu.CompilerParams(
            dimension_semantics=("parallel",)),
    )(x_packed, wm)

    out = (out_packed.reshape(G, H, P, W)
           .transpose(0, 2, 1, 3)
           .reshape(G * P, H, W)[:NC]
           .reshape(N, C, H, W))
    return out


def _reference(x, weights):
    # Pure-JAX reference: depthwise conv (feature_group_count=C) + ReLU.
    out = lax.conv_general_dilated(
        x, weights, window_strides=(1, 1), padding=((1, 1), (1, 1)),
        dimension_numbers=("NCHW", "OIHW", "NCHW"),
        feature_group_count=weights.shape[0])
    return jnp.maximum(out, 0.0)


if __name__ == "__main__":
    # Deterministic parameter init, exactly as the PyTorch __init__ builds it:
    # the 3x3 Laplacian kernel repeated for each of the 3 grouped channels.
    lap = np.array([-1, -1, -1, -1, 8, -1, -1, -1, -1],
                   dtype=np.float32).reshape(1, 1, 3, 3)
    weights = jnp.asarray(np.repeat(lap, 3, axis=0))  # (3, 1, 3, 3)

    key = jax.random.PRNGKey(0)
    x = jax.random.normal(key, (2, 3, 16, 16), dtype=jnp.float32)

    out = laplacian_conv_layer(x, weights)
    out = jax.block_until_ready(out)

    ref = _reference(x, weights)
    np.testing.assert_allclose(np.asarray(out), np.asarray(ref),
                               rtol=1e-5, atol=1e-5)
    print("KERNEL_OK")
</pallas_src>

<mosaic_0001>
module attributes {stable_mosaic.version = 11 : i64} {
  func.func @_laplacian_kernel(%arg0: i32, %arg1: memref<1x16x128xf32, #tpu.memory_space<vmem>>, %arg2: memref<1x9x128xf32, #tpu.memory_space<vmem>>, %arg3: memref<1x16x128xf32, #tpu.memory_space<vmem>>) attributes {dimension_semantics = [#tpu.dimension_semantics<parallel>], iteration_bounds = array<i64: 1>, scalar_prefetch = 0 : i64, scratch_operands = 0 : i64, tpu.core_type = #tpu.core_type<tc>, window_params = [{transform_indices = @transform_0, window_bounds = array<i64: 1, 16, 128>}, {transform_indices = @transform_1, window_bounds = array<i64: 1, 9, 128>}, {transform_indices = @transform_2, window_bounds = array<i64: 1, 16, 128>}]} {
    %c0 = arith.constant 0 : index
    %c0_0 = arith.constant 0 : index
    %c0_1 = arith.constant 0 : index
    %0 = vector.load %arg1[%c0, %c0_0, %c0_1] : memref<1x16x128xf32, #tpu.memory_space<vmem>>, vector<1x16x128xf32>
    %1 = vector.shape_cast %0 : vector<1x16x128xf32> to vector<16x128xf32>
    %c0_2 = arith.constant 0 : index
    %c0_3 = arith.constant 0 : index
    %c0_4 = arith.constant 0 : index
    %2 = vector.load %arg2[%c0_2, %c0_3, %c0_4] : memref<1x9x128xf32, #tpu.memory_space<vmem>>, vector<1x9x128xf32>
    %3 = vector.shape_cast %2 : vector<1x9x128xf32> to vector<9x128xf32>
    %4 = tpu.iota {dimensions = array<i32: 0>} : vector<16x1xi32>
    %cst = arith.constant 0.000000e+00 : f32
    %5 = vector.broadcast %cst : f32 to vector<16x128xf32>
    %c1_i32 = arith.constant 1 : i32
    %6 = tpu.dynamic_rotate %1 by %c1_i32 dim 0 : vector<16x128xf32>, i32 -> vector<16x128xf32>
    %c-1_i32 = arith.constant -1 : i32
    %7 = vector.broadcast %c-1_i32 : i32 to vector<16x1xi32>
    %8 = arith.addi %4, %7 : vector<16x1xi32>
    %c0_i32 = arith.constant 0 : i32
    %9 = vector.broadcast %c0_i32 : i32 to vector<16x1xi32>
    %10 = arith.cmpi sge, %8, %9 : vector<16x1xi32>
    %c-1_i32_5 = arith.constant -1 : i32
    %11 = vector.broadcast %c-1_i32_5 : i32 to vector<16x1xi32>
    %12 = arith.addi %4, %11 : vector<16x1xi32>
    %c16_i32 = arith.constant 16 : i32
    %13 = vector.broadcast %c16_i32 : i32 to vector<16x1xi32>
    %14 = arith.cmpi slt, %12, %13 : vector<16x1xi32>
    %15 = arith.andi %10, %14 : vector<16x1xi1>
    %16 = arith.extui %15 : vector<16x1xi1> to vector<16x1xi32>
    %17 = arith.sitofp %16 : vector<16x1xi32> to vector<16x1xf32>
    %18 = vector.broadcast %17 : vector<16x1xf32> to vector<16x128xf32>
    %19 = arith.mulf %6, %18 : vector<16x128xf32>
    %c1_i32_6 = arith.constant 1 : i32
    %20 = tpu.dynamic_rotate %19 by %c1_i32_6 dim 1 : vector<16x128xf32>, i32 -> vector<16x128xf32>
    %21 = vector.extract_strided_slice %3 {offsets = [0, 0], sizes = [1, 128], strides = [1, 1]} : vector<9x128xf32> to vector<1x128xf32>
    %22 = vector.shape_cast %21 : vector<1x128xf32> to vector<128xf32>
    %23 = vector.shape_cast %22 : vector<128xf32> to vector<1x128xf32>
    %24 = vector.broadcast %23 : vector<1x128xf32> to vector<16x128xf32>
    %25 = arith.mulf %24, %20 : vector<16x128xf32>
    %26 = arith.addf %5, %25 : vector<16x128xf32>
    %27 = vector.extract_strided_slice %3 {offsets = [1, 0], sizes = [1, 128], strides = [1, 1]} : vector<9x128xf32> to vector<1x128xf32>
    %28 = vector.shape_cast %27 : vector<1x128xf32> to vector<128xf32>
    %29 = vector.shape_cast %28 : vector<128xf32> to vector<1x128xf32>
    %30 = vector.broadcast %29 : vector<1x128xf32> to vector<16x128xf32>
    %31 = arith.mulf %30, %19 : vector<16x128xf32>
    %32 = arith.addf %26, %31 : vector<16x128xf32>
    %c127_i32 = arith.constant 127 : i32
    %33 = tpu.dynamic_rotate %19 by %c127_i32 dim 1 : vector<16x128xf32>, i32 -> vector<16x128xf32>
    %34 = vector.extract_strided_slice %3 {offsets = [2, 0], sizes = [1, 128], strides = [1, 1]} : vector<9x128xf32> to vector<1x128xf32>
    %35 = vector.shape_cast %34 : vector<1x128xf32> to vector<128xf32>
    %36 = vector.shape_cast %35 : vector<128xf32> to vector<1x128xf32>
    %37 = vector.broadcast %36 : vector<1x128xf32> to vector<16x128xf32>
    %38 = arith.mulf %37, %33 : vector<16x128xf32>
    %39 = arith.addf %32, %38 : vector<16x128xf32>
    %c1_i32_7 = arith.constant 1 : i32
    %40 = tpu.dynamic_rotate %1 by %c1_i32_7 dim 1 : vector<16x128xf32>, i32 -> vector<16x128xf32>
    %41 = vector.extract_strided_slice %3 {offsets = [3, 0], sizes = [1, 128], strides = [1, 1]} : vector<9x128xf32> to vector<1x128xf32>
    %42 = vector.shape_cast %41 : vector<1x128xf32> to vector<128xf32>
    %43 = vector.shape_cast %42 : vector<128xf32> to vector<1x128xf32>
    %44 = vector.broadcast %43 : vector<1x128xf32> to vector<16x128xf32>
    %45 = arith.mulf %44, %40 : vector<16x128xf32>
    %46 = arith.addf %39, %45 : vector<16x128xf32>
    %47 = vector.extract_strided_slice %3 {offsets = [4, 0], sizes = [1, 128], strides = [1, 1]} : vector<9x128xf32> to vector<1x128xf32>
    %48 = vector.shape_cast %47 : vector<1x128xf32> to vector<128xf32>
    %49 = vector.shape_cast %48 : vector<128xf32> to vector<1x128xf32>
    %50 = vector.broadcast %49 : vector<1x128xf32> to vector<16x128xf32>
    %51 = arith.mulf %50, %1 : vector<16x128xf32>
    %52 = arith.addf %46, %51 : vector<16x128xf32>
    %c127_i32_8 = arith.constant 127 : i32
    %53 = tpu.dynamic_rotate %1 by %c127_i32_8 dim 1 : vector<16x128xf32>, i32 -> vector<16x128xf32>
    %54 = vector.extract_strided_slice %3 {offsets = [5, 0], sizes = [1, 128], strides = [1, 1]} : vector<9x128xf32> to vector<1x128xf32>
    %55 = vector.shape_cast %54 : vector<1x128xf32> to vector<128xf32>
    %56 = vector.shape_cast %55 : vector<128xf32> to vector<1x128xf32>
    %57 = vector.broadcast %56 : vector<1x128xf32> to vector<16x128xf32>
    %58 = arith.mulf %57, %53 : vector<16x128xf32>
    %59 = arith.addf %52, %58 : vector<16x128xf32>
    %c15_i32 = arith.constant 15 : i32
    %60 = tpu.dynamic_rotate %1 by %c15_i32 dim 0 : vector<16x128xf32>, i32 -> vector<16x128xf32>
    %c1_i32_9 = arith.constant 1 : i32
    %61 = vector.broadcast %c1_i32_9 : i32 to vector<16x1xi32>
    %62 = arith.addi %4, %61 : vector<16x1xi32>
    %c0_i32_10 = arith.constant 0 : i32
    %63 = vector.broadcast %c0_i32_10 : i32 to vector<16x1xi32>
    %64 = arith.cmpi sge, %62, %63 : vector<16x1xi32>
    %c1_i32_11 = arith.constant 1 : i32
    %65 = vector.broadcast %c1_i32_11 : i32 to vector<16x1xi32>
    %66 = arith.addi %4, %65 : vector<16x1xi32>
    %c16_i32_12 = arith.constant 16 : i32
    %67 = vector.broadcast %c16_i32_12 : i32 to vector<16x1xi32>
    %68 = arith.cmpi slt, %66, %67 : vector<16x1xi32>
    %69 = arith.andi %64, %68 : vector<16x1xi1>
    %70 = arith.extui %69 : vector<16x1xi1> to vector<16x1xi32>
    %71 = arith.sitofp %70 : vector<16x1xi32> to vector<16x1xf32>
    %72 = vector.broadcast %71 : vector<16x1xf32> to vector<16x128xf32>
    %73 = arith.mulf %60, %72 : vector<16x128xf32>
    %c1_i32_13 = arith.constant 1 : i32
    %74 = tpu.dynamic_rotate %73 by %c1_i32_13 dim 1 : vector<16x128xf32>, i32 -> vector<16x128xf32>
    %75 = vector.extract_strided_slice %3 {offsets = [6, 0], sizes = [1, 128], strides = [1, 1]} : vector<9x128xf32> to vector<1x128xf32>
    %76 = vector.shape_cast %75 : vector<1x128xf32> to vector<128xf32>
    %77 = vector.shape_cast %76 : vector<128xf32> to vector<1x128xf32>
    %78 = vector.broadcast %77 : vector<1x128xf32> to vector<16x128xf32>
    %79 = arith.mulf %78, %74 : vector<16x128xf32>
    %80 = arith.addf %59, %79 : vector<16x128xf32>
    %81 = vector.extract_strided_slice %3 {offsets = [7, 0], sizes = [1, 128], strides = [1, 1]} : vector<9x128xf32> to vector<1x128xf32>
    %82 = vector.shape_cast %81 : vector<1x128xf32> to vector<128xf32>
    %83 = vector.shape_cast %82 : vector<128xf32> to vector<1x128xf32>
    %84 = vector.broadcast %83 : vector<1x128xf32> to vector<16x128xf32>
    %85 = arith.mulf %84, %73 : vector<16x128xf32>
    %86 = arith.addf %80, %85 : vector<16x128xf32>
    %c127_i32_14 = arith.constant 127 : i32
    %87 = tpu.dynamic_rotate %73 by %c127_i32_14 dim 1 : vector<16x128xf32>, i32 -> vector<16x128xf32>
    %88 = vector.extract_strided_slice %3 {offsets = [8, 0], sizes = [1, 128], strides = [1, 1]} : vector<9x128xf32> to vector<1x128xf32>
    %89 = vector.shape_cast %88 : vector<1x128xf32> to vector<128xf32>
    %90 = vector.shape_cast %89 : vector<128xf32> to vector<1x128xf32>
    %91 = vector.broadcast %90 : vector<1x128xf32> to vector<16x128xf32>
    %92 = arith.mulf %91, %87 : vector<16x128xf32>
    %93 = arith.addf %86, %92 : vector<16x128xf32>
    %cst_15 = arith.constant 0.000000e+00 : f32
    %94 = vector.broadcast %cst_15 : f32 to vector<16x128xf32>
    %95 = arith.maximumf %93, %94 : vector<16x128xf32>
    %c0_16 = arith.constant 0 : index
    %c0_17 = arith.constant 0 : index
    %c0_18 = arith.constant 0 : index
    %96 = vector.load %arg3[%c0_16, %c0_17, %c0_18] : memref<1x16x128xf32, #tpu.memory_space<vmem>>, vector<1x16x128xf32>
    %97 = vector.shape_cast %96 : vector<1x16x128xf32> to vector<16x128xf32>
    %98 = vector.shape_cast %95 : vector<16x128xf32> to vector<1x16x128xf32>
    tpu.vector_store %arg3[%c0_16, %c0_17, %c0_18], %98 {strides = array<i32>} : memref<1x16x128xf32, #tpu.memory_space<vmem>>, vector<1x16x128xf32>,
    return
  }
  func.func @transform_0(%arg0: i32) -> (i32, i32, i32) {
    %c0_i32 = arith.constant 0 : i32
    %c0_i32_0 = arith.constant 0 : i32
    %c0_i32_1 = arith.constant 0 : i32
    return %arg0, %c0_i32, %c0_i32_0 : i32, i32, i32
  }
  func.func @transform_1(%arg0: i32) -> (i32, i32, i32) {
    %c0_i32 = arith.constant 0 : i32
    %c0_i32_0 = arith.constant 0 : i32
    %c0_i32_1 = arith.constant 0 : i32
    return %arg0, %c0_i32, %c0_i32_0 : i32, i32, i32
  }
  func.func @transform_2(%arg0: i32) -> (i32, i32, i32) {
    %c0_i32 = arith.constant 0 : i32
    %c0_i32_0 = arith.constant 0 : i32
    %c0_i32_1 = arith.constant 0 : i32
    return %arg0, %c0_i32, %c0_i32_0 : i32, i32, i32
  }
}

</mosaic_0001>

<llo_original>
// kernel: tpu_custom_call.1
$region0: #{tpu_custom_call.1}
  #allocation0 [shape = 'u32[]', space=smem, size = 0x4, offset = 0x4, fixed_abs, tag = 'smem constant byte address 0x4 - core index']
  #allocation1 [shape = 'u32[144,128]{1,0:T(1,128)}', space=vmem, size = 0x12000, scoped, tag = 'internal scratch']
  %s0 = inlined_call_operand.vmem [shape: f32[1,16,128], index: 0, kind: input, shape index: {}]
  %s1 = inlined_call_operand.vmem [shape: f32[1,9,128], index: 1, kind: input, shape index: {}]
  %s2 = inlined_call_operand.hbm [shape: f32[1,16,128], index: 2, kind: output, shape index: {}]
  %s3 = sld [smem:[#allocation0]]
  $region18: #{tpu_custom_call.1} parent=0
    _
  %s5 = ssub.s32 1, %s3
  %s6 = scalar_select 0, %s5, %s3
  $region1: #{tpu_custom_call.1} parent=0
    #allocation2 [shape = 'u8[8192]{0}', space=vmem, size = 0x2000, scoped, tag = 'output window, operand 0, single buffered']
    #allocation3 [shape = 's32[1]{0}', space=sflag, size = 0x4, scoped, tag = 'scoped memory for tpu_custom_call.1']
    %7 = vsyncpa [#allocation3], 0
    // Predicated region
    $region2: #{tpu_custom_call.1} parent=1 // pred_check
      _
    $region3: #{tpu_custom_call.1} parent=1 // pred_check_branch
      %9 = sbr.rel (0) target = $region5
    $region4: #{tpu_custom_call.1} parent=1 // pred_region
      _
    $region5: #{tpu_custom_call.1} parent=1 // pred_fallthru
      _
    // Predicated region
    $region6: #{tpu_custom_call.1} parent=1 // pred_check
      _
    $region7: #{tpu_custom_call.1} parent=1 // pred_check_branch
      %11 = sbr.rel (0) target = $region9
    $region8: #{tpu_custom_call.1} parent=1 // pred_region
      _
    $region9: #{tpu_custom_call.1} parent=1 // pred_fallthru
      _
    %v12 = vld [vmem:[%s0] sm:$0xff]
    %v13 = vld [vmem:[%s0 + $0x8] sm:$0xff]
    %v14 = vld [vmem:[%s1] sm:$0xff]
    %v15 = vld [vmem:[%s1 + $0x8] sm:$0x1]
    %v16 = vlaneseq
    %v17 = vshrl.u32 %v16, 7
    %v18 = vadd.s32 %v17, 8
    %v19 = vrot.slane %v12, 7
    %v20 = vrot.slane %v13, 7
    %vm21 = vcmp.lt.s32.totalorder %v17, 1
    %v22 = vsel %vm21, %v19, %v20
    %v23 = vsel %vm21, %v20, %v19
    %v24 = vadd.s32 %v17, 4294967295
    %v25 = vadd.s32 %v18, 4294967295
    %vm26 = vcmp.ge.s32.totalorder %v24, 0
    %vm27 = vcmp.ge.s32.totalorder %v25, 0
    %vm28 = vcmp.lt.s32.totalorder %v24, 16
    %vm29 = vcmp.lt.s32.totalorder %v25, 16
    %vm30 = vmand %vm26, %vm28
    %vm31 = vmand %vm27, %vm29
    %v32 = vsel %vm30, 1, 0
    %v33 = vsel %vm31, 1, 0
    %v34 = vcvt.s32.f32 %v32
    %v35 = vcvt.s32.f32 %v33
    %v36 = vmul.f32 %v23, %v34
    %v37 = vmul.f32 %v22, %v35
    %38 = vrot.lane.b32.xlu0 %v36, 1
    %v39 = vpop.permute.xlu0 %38
    %40 = vrot.lane.b32.xlu0 %v37, 1
    %v41 = vpop.permute.xlu0 %40
    %v42 = vlaneseq
    %v43 = vshrl.u32 %v42, 7
    %v44 = vsub.s32 0, %v43
    %v45 = vrot.slane %v14, %v44
    %v46 = vmul.f32 %v45, %v39
    %v47 = vmul.f32 %v45, %v41
    %v48 = vadd.f32 %v46, 0.0
    %v49 = vadd.f32 %v47, 0.0
    %v50 = vlaneseq
    %v51 = vshrl.u32 %v50, 7
    %v52 = vsub.s32 1, %v51
    %v53 = vrot.slane %v14, %v52
    %v54 = vmul.f32 %v53, %v36
    %v55 = vmul.f32 %v53, %v37
    %v56 = vadd.f32 %v48, %v54
    %v57 = vadd.f32 %v49, %v55
    %58 = vrot.lane.b32.xlu0 %v36, 127
    %v59 = vpop.permute.xlu0 %58
    %60 = vrot.lane.b32.xlu0 %v37, 127
    %v61 = vpop.permute.xlu0 %60
    %v62 = vlaneseq
    %v63 = vshrl.u32 %v62, 7
    %v64 = vsub.s32 2, %v63
    %v65 = vrot.slane %v14, %v64
    %v66 = vmul.f32 %v65, %v59
    %v67 = vmul.f32 %v65, %v61
    %v68 = vadd.f32 %v56, %v66
    %v69 = vadd.f32 %v57, %v67
    %70 = vrot.lane.b32.xlu0 %v12, 1
    %v71 = vpop.permute.xlu0 %70
    %72 = vrot.lane.b32.xlu0 %v13, 1
    %v73 = vpop.permute.xlu0 %72
    %v74 = vlaneseq
    %v75 = vshrl.u32 %v74, 7
    %v76 = vsub.s32 3, %v75
    %v77 = vrot.slane %v14, %v76
    %v78 = vmul.f32 %v77, %v71
    %v79 = vmul.f32 %v77, %v73
    %v80 = vadd.f32 %v68, %v78
    %v81 = vadd.f32 %v69, %v79
    %v82 = vlaneseq
    %v83 = vshrl.u32 %v82, 7
    %v84 = vsub.s32 4, %v83
    %v85 = vrot.slane %v14, %v84
    %v86 = vmul.f32 %v85, %v12
    %v87 = vmul.f32 %v85, %v13
    %v88 = vadd.f32 %v80, %v86
    %v89 = vadd.f32 %v81, %v87
    %90 = vrot.lane.b32.xlu0 %v12, 127
    %v91 = vpop.permute.xlu0 %90
    %92 = vrot.lane.b32.xlu0 %v13, 127
    %v93 = vpop.permute.xlu0 %92
    %v94 = vlaneseq
    %v95 = vshrl.u32 %v94, 7
    %v96 = vsub.s32 5, %v95
    %v97 = vrot.slane %v14, %v96
    %v98 = vmul.f32 %v97, %v91
    %v99 = vmul.f32 %v97, %v93
    %v100 = vadd.f32 %v88, %v98
    %v101 = vadd.f32 %v89, %v99
    %v102 = vrot.slane %v12, 1
    %v103 = vrot.slane %v13, 1
    %vm104 = vcmp.lt.s32.totalorder %v17, 7
    %v105 = vsel %vm104, %v102, %v103
    %v106 = vsel %vm104, %v103, %v102
    %v107 = vadd.s32 %v17, 1
    %v108 = vadd.s32 %v18, 1
    %vm109 = vcmp.ge.s32.totalorder %v107, 0
    %vm110 = vcmp.ge.s32.totalorder %v108, 0
    %vm111 = vcmp.lt.s32.totalorder %v107, 16
    %vm112 = vcmp.lt.s32.totalorder %v108, 16
    %vm113 = vmand %vm109, %vm111
    %vm114 = vmand %vm110, %vm112
    %v115 = vsel %vm113, 1, 0
    %v116 = vsel %vm114, 1, 0
    %v117 = vcvt.s32.f32 %v115
    %v118 = vcvt.s32.f32 %v116
    %v119 = vmul.f32 %v105, %v117
    %v120 = vmul.f32 %v106, %v118
    %121 = vrot.lane.b32.xlu0 %v119, 1
    %v122 = vpop.permute.xlu0 %121
    %123 = vrot.lane.b32.xlu0 %v120, 1
    %v124 = vpop.permute.xlu0 %123
    %v125 = vlaneseq
    %v126 = vshrl.u32 %v125, 7
    %v127 = vsub.s32 6, %v126
    %v128 = vrot.slane %v14, %v127
    %v129 = vmul.f32 %v128, %v122
    %v130 = vmul.f32 %v128, %v124
    %v131 = vadd.f32 %v100, %v129
    %v132 = vadd.f32 %v101, %v130
    %v133 = vlaneseq
    %v134 = vshrl.u32 %v133, 7
    %v135 = vsub.s32 7, %v134
    %v136 = vrot.slane %v14, %v135
    %v137 = vmul.f32 %v136, %v119
    %v138 = vmul.f32 %v136, %v120
    %v139 = vadd.f32 %v131, %v137
    %v140 = vadd.f32 %v132, %v138
    %141 = vrot.lane.b32.xlu0 %v119, 127
    %v142 = vpop.permute.xlu0 %141
    %143 = vrot.lane.b32.xlu0 %v120, 127
    %v144 = vpop.permute.xlu0 %143
    %v145 = vlaneseq
    %v146 = vshrl.u32 %v145, 7
    %v147 = vsub.s32 0, %v146
    %v148 = vrot.slane %v15, %v147
    %v149 = vmul.f32 %v148, %v142
    %v150 = vmul.f32 %v148, %v144
    %v151 = vadd.f32 %v139, %v149
    %v152 = vadd.f32 %v140, %v150
    %v153 = vmax.f32 %v151, 0.0
    %v154 = vmax.f32 %v152, 0.0
    %155 = vst [vmem:[#allocation2] sm:$0xff] %v153
    %156 = vst [vmem:[#allocation2 + $0x8] sm:$0xff] %v154
    // Predicated region
    $region10: #{tpu_custom_call.1} parent=1 // pred_check
      _
    $region11: #{tpu_custom_call.1} parent=1 // pred_check_branch
      %158 = sbr.rel (0) target = $region13
    $region12: #{tpu_custom_call.1} parent=1 // pred_region
      %s160 = ssub.s32 256, 256
      %161 = vsyncadd [#allocation3], %s160
      %s162 = sshll.u32 [#allocation2], 4
      %s163 = int_to_ptr.vmem [resolvable:$true] %s162
      %168 = dma.vmem_to_hbm [thread:$0]  %s163, 256, %s2, [#allocation3], 128, 128, 8
    $region13: #{tpu_custom_call.1} parent=1 // pred_fallthru
      _
    // Predicated region
    $region14: #{tpu_custom_call.1} parent=1 // pred_check
      _
    $region15: #{tpu_custom_call.1} parent=1 // pred_check_branch
      %170 = sbr.rel (0) target = $region17
    $region16: #{tpu_custom_call.1} parent=1 // pred_region
      %171 = dma.done [#allocation3], 256
    $region17: #{tpu_custom_call.1} parent=1 // pred_fallthru
      _
    %172 = vsyncpa [#allocation3], 1

</llo_original>
